<compile_context>
chip_gen: v6e
topology: v6e:2x2x1
jax: 0.10.0
libtpu: 0.0.40
codegen_flags: <defaults>
</compile_context>

<pallas_src>
import math

import jax
import jax.numpy as jnp
from jax.experimental import pallas as pl
from jax.experimental.pallas import tpu as pltpu


def _channel_gate_kernel(x_ref, w1_ref, b1_ref, w2_ref, b2m_ref,
                         res_ref, scale_ref):
    """grid = (N_tiles,), one step per N-tile.

    Per grid step everything is resident in VMEM: the x tile for ALL B batches
    (read from HBM once), the bf16 block-diagonal dynamic weights / f32 biases
    (constant index_map -> fetched once for the whole kernel), and the f32
    scale output block, which doubles as the batch-reduction accumulator.
    """
    B = x_ref.shape[0]

    def _loop(step_fn):
        # Tiny static batch: unroll at trace time (bulletproof static indexing,
        # LLO sees the whole body).  Larger batch: bound code size with fori.
        if B <= 8:
            for b in range(B):
                step_fn(b)
        else:
            def body(b, carry):
                step_fn(b)
                return carry
            jax.lax.fori_loop(0, B, body, 0)

    # ---- phase A: batch-reduced dynamic MLP (accumulate into scale block) ----
    scale_ref[...] = jnp.zeros_like(scale_ref)

    def mlp_step(b):
        x = x_ref[b].astype(jnp.bfloat16)                       # (tn, Cw)
        h = jnp.dot(x, w1_ref[b],
                    preferred_element_type=jnp.float32) + b1_ref[b]
        h = jnp.maximum(h, 0.0)
        y = jnp.dot(h.astype(jnp.bfloat16), w2_ref[b],
                    preferred_element_type=jnp.float32)         # (tn, Cw)
        scale_ref[...] += y                                     # b2 folded below

    _loop(mlp_step)

    # mean over batch (+ batch-mean of b2, added once), then sigmoid.
    scale_ref[...] = jax.nn.sigmoid(scale_ref[...] * (1.0 / B) + b2m_ref[...])

    # ---- phase B: gating multiply for all batches, x still resident ----------
    def gate_step(b):
        res_ref[b] = (x_ref[b] * scale_ref[...]).astype(res_ref.dtype)

    _loop(gate_step)


def _block_diag(w, g):
    """(B, a, b) -> (B, g*a, g*b) with g copies of w on the block diagonal."""
    if g == 1:
        return w
    B, a, b = w.shape
    eye = jnp.eye(g, dtype=w.dtype)
    return jnp.einsum("gh,bij->bgihj", eye, w).reshape(B, g * a, g * b)


def _vmem_limit_bytes():
    """Per-generation scoped-VMEM request (v5e/v6e: 128 MiB physical,
    v7x: 64 MiB per TensorCore); leave headroom below physical capacity."""
    try:
        cap = int(pltpu.get_tpu_info().vmem_capacity_bytes)
    except Exception:
        cap = 64 << 20  # conservative (v7x per-core VMEM)
    return max(16 << 20, min(int(cap * 0.6), 96 << 20))


def _pick_n_tile(n, per_row_bytes, budget_bytes):
    """Largest multiple-of-8 divisor of n whose per-grid-step VMEM footprint
    stays under budget; prefers >= 2 tiles so the single 'parallel' axis can be
    split across v7x's two TensorCores.  Falls back to the full extent if n has
    no multiple-of-8 divisor (a full-extent block is always a legal shape)."""
    cap = max(8, budget_bytes // max(per_row_bytes, 1))
    divs = [d for d in range(8, n + 1, 8) if n % d == 0]
    if not divs:
        # TODO(synk): handle N with no multiple-of-8 divisor via padding /
        # remainder tiles instead of a single full-extent tile.
        return n
    fitting = [d for d in divs if d <= cap] or [divs[0]]
    tn = fitting[-1]
    if n // tn < 2:  # keep the megacore 'parallel' axis >= 2 when possible
        multi = [d for d in fitting if n // d >= 2]
        if multi:
            tn = multi[-1]
    return tn


def channel_gate_pallas(x, w1, b1, w2, b2):
    """x: (B, N, C); w1: (B, C, Cr); b1: (B, Cr); w2: (B, Cr, C); b2: (B, C).
    Returns (res (B, N, C), scale (1, N, C))."""
    B, N, C = x.shape
    Cr = w1.shape[-1]

    # ---- lane-dense channel folding: (N, C) viewed as (N/g, g*C), g*C % 128 == 0
    g = 1
    if C % 128 != 0:
        cand = 128 // math.gcd(C, 128)
        if N % cand == 0:
            g = cand
    Ng, Cw, Crw = N // g, g * C, g * Cr

    x_v = x.reshape(B, Ng, Cw)

    # Fold per-sample dynamic weights into block-diagonal form (tiny JAX glue),
    # pre-cast to bf16 for the MXU; biases stay f32.
    w1f = _block_diag(w1, g).astype(jnp.bfloat16)                 # (B, Cw, Crw)
    w2f = _block_diag(w2, g).astype(jnp.bfloat16)                 # (B, Crw, Cw)
    b1f = jnp.tile(b1, (1, g)).reshape(B, 1, Crw)                 # (B, 1, Crw)
    # mean_b(y_b + b2_b) == mean_b(y_b) + mean_b(b2_b): add b2 once, after the
    # batch reduction.
    b2m = jnp.tile(jnp.mean(b2, axis=0, keepdims=True), (1, g))   # (1, Cw)

    # ---- per-generation VMEM sizing -----------------------------------------
    vmem_limit = _vmem_limit_bytes()
    itemsize = jnp.dtype(x.dtype).itemsize
    # double-buffered x in + res out + scale out, per row of the N tile
    per_row_bytes = 2 * (B * Cw * itemsize) + 2 * (B * Cw * itemsize) \
        + 2 * (Cw * 4)
    wbytes = 2 * (w1f.nbytes + w2f.nbytes + b1f.nbytes + b2m.nbytes)
    tile_budget = max(1 << 20, int(vmem_limit * 0.7) - wbytes)

    tn = _pick_n_tile(Ng, per_row_bytes, tile_budget)
    n_tiles = Ng // tn

    res_v, scale_v = pl.pallas_call(
        _channel_gate_kernel,
        out_shape=(
            jax.ShapeDtypeStruct((B, Ng, Cw), x.dtype),
            jax.ShapeDtypeStruct((Ng, Cw), jnp.float32),
        ),
        grid_spec=pltpu.PrefetchScalarGridSpec(
            num_scalar_prefetch=0,
            grid=(n_tiles,),
            in_specs=[
                # x tile for ALL batches: the only per-step DMA (read once).
                pl.BlockSpec((B, tn, Cw), lambda n: (0, n, 0)),
                # Dynamic weights / biases: tiny, resident (constant index_map).
                pl.BlockSpec((B, Cw, Crw), lambda n: (0, 0, 0)),
                pl.BlockSpec((B, 1, Crw), lambda n: (0, 0, 0)),
                pl.BlockSpec((B, Crw, Cw), lambda n: (0, 0, 0)),
                pl.BlockSpec((1, Cw), lambda n: (0, 0)),
            ],
            out_specs=[
                pl.BlockSpec((B, tn, Cw), lambda n: (0, n, 0)),
                pl.BlockSpec((tn, Cw), lambda n: (n, 0)),
            ],
        ),
        compiler_params=pltpu.CompilerParams(
            dimension_semantics=("parallel",),
            vmem_limit_bytes=int(vmem_limit),
        ),
    )(x_v, w1f, b1f, w2f, b2m)

    # Unfold back to the caller's layout; keepdim batch axis to match torch's
    # mean(dim=0, keepdim=True) output.
    res = res_v.reshape(B, N, C)
    scale = scale_v.reshape(N, C).reshape(1, N, C)
    return res, scale


def decode_dynamic_linear(mu, W_dec, b_dec, V, in_dim, out_dim, k):
    """ParamDecoder + weight/bias split of DynamicLinear (tiny; plain JAX glue).
    W_dec: ((in_dim+1)*k, mu_dim) torch-Linear layout, b_dec: ((in_dim+1)*k,),
    V: (k, out_dim).  Returns weight (B, in_dim, out_dim), bias (B, out_dim)."""
    B = mu.shape[0]
    U = (mu @ W_dec.T + b_dec).reshape(B, in_dim + 1, k)
    param = jnp.einsum("bik,kj->bij", U, V)  # (B, in_dim+1, out_dim)
    return param[:, :-1, :], param[:, -1, :]


if __name__ == "__main__":
    B, N = 2, 16
    gate_channels = 32
    reduction_ratio = 16
    Cr = gate_channels // reduction_ratio
    text_dim = 8
    k = 30

    keys = jax.random.split(jax.random.PRNGKey(0), 8)
    x = jax.random.normal(keys[0], (B, N, gate_channels), jnp.float32)
    mu = jax.random.normal(keys[1], (B, text_dim), jnp.float32)

    # Parameters of the two ParamDecoders (deterministic, in-script).
    # NOTE: torch inits V to zeros (trivial output); we use small nonzero
    # deterministic values to exercise the full compute path.
    Wd1 = 0.1 * jax.random.normal(keys[2], ((gate_channels + 1) * k, text_dim), jnp.float32)
    bd1 = 0.1 * jax.random.normal(keys[3], ((gate_channels + 1) * k,), jnp.float32)
    V1 = 0.1 * jax.random.normal(keys[4], (k, Cr), jnp.float32)
    Wd2 = 0.1 * jax.random.normal(keys[5], ((Cr + 1) * k, text_dim), jnp.float32)
    bd2 = 0.1 * jax.random.normal(keys[6], ((Cr + 1) * k,), jnp.float32)
    V2 = 0.1 * jax.random.normal(keys[7], (k, gate_channels), jnp.float32)

    # Decode per-sample dynamic weights (glue).
    w1, b1 = decode_dynamic_linear(mu, Wd1, bd1, V1, gate_channels, Cr, k)
    w2, b2 = decode_dynamic_linear(mu, Wd2, bd2, V2, Cr, gate_channels, k)

    res, scale = channel_gate_pallas(x, w1, b1, w2, b2)
    res = jax.block_until_ready(res)
    scale = jax.block_until_ready(scale)

    # Pure-JAX f32 reference of the ChannelGate forward.
    h_ref = jnp.einsum("bnd,bde->bne", x, w1) + b1[:, None, :]
    h_ref = jnp.maximum(h_ref, 0.0)
    y_ref = jnp.einsum("bne,bef->bnf", h_ref, w2) + b2[:, None, :]
    scale_ref = jax.nn.sigmoid(y_ref.mean(axis=0, keepdims=True))
    res_ref = x * scale_ref

    assert res.shape == (B, N, gate_channels)
    assert scale.shape == (1, N, gate_channels)
    # bf16 MXU operands -> looser tolerance vs the pure-f32 reference.
    assert jnp.allclose(res, res_ref, atol=1e-2, rtol=1e-2), "mismatch vs reference"
    assert jnp.allclose(scale, scale_ref, atol=1e-2, rtol=1e-2), "scale mismatch"
    print("KERNEL_OK")
</pallas_src>

<mosaic_0001>
module attributes {stable_mosaic.version = 11 : i64} {
  func.func @_channel_gate_kernel(%arg0: i32, %arg1: memref<2x4x128xf32, #tpu.memory_space<vmem>>, %arg2: memref<2x128x8xbf16, #tpu.memory_space<vmem>>, %arg3: memref<2x1x8xf32, #tpu.memory_space<vmem>>, %arg4: memref<2x8x128xbf16, #tpu.memory_space<vmem>>, %arg5: memref<1x128xf32, #tpu.memory_space<vmem>>, %arg6: memref<2x4x128xf32, #tpu.memory_space<vmem>>, %arg7: memref<4x128xf32, #tpu.memory_space<vmem>>) attributes {dimension_semantics = [#tpu.dimension_semantics<parallel>], iteration_bounds = array<i64: 1>, scalar_prefetch = 0 : i64, scratch_operands = 0 : i64, tpu.core_type = #tpu.core_type<tc>, window_params = [{transform_indices = @transform_0, window_bounds = array<i64: 2, 4, 128>}, {pipeline_mode = #tpu.pipeline_mode<synchronous>, transform_indices = @transform_1, window_bounds = array<i64: 2, 128, 8>}, {pipeline_mode = #tpu.pipeline_mode<synchronous>, transform_indices = @transform_2, window_bounds = array<i64: 2, 1, 8>}, {pipeline_mode = #tpu.pipeline_mode<synchronous>, transform_indices = @transform_3, window_bounds = array<i64: 2, 8, 128>}, {pipeline_mode = #tpu.pipeline_mode<synchronous>, transform_indices = @transform_4, window_bounds = array<i64: 1, 128>}, {transform_indices = @transform_5, window_bounds = array<i64: 2, 4, 128>}, {transform_indices = @transform_6, window_bounds = array<i64: 4, 128>}]} {
    %cst = arith.constant 0.000000e+00 : f32
    %0 = vector.broadcast %cst : f32 to vector<4x128xf32>
    %c0 = arith.constant 0 : index
    %c0_0 = arith.constant 0 : index
    %1 = vector.load %arg7[%c0, %c0_0] : memref<4x128xf32, #tpu.memory_space<vmem>>, vector<4x128xf32>
    tpu.vector_store %arg7[%c0, %c0_0], %0 {strides = array<i32>} : memref<4x128xf32, #tpu.memory_space<vmem>>, vector<4x128xf32>,
    %c0_1 = arith.constant 0 : index
    %c0_2 = arith.constant 0 : index
    %c0_3 = arith.constant 0 : index
    %2 = vector.load %arg1[%c0_1, %c0_2, %c0_3] : memref<2x4x128xf32, #tpu.memory_space<vmem>>, vector<1x4x128xf32>
    %3 = vector.shape_cast %2 : vector<1x4x128xf32> to vector<4x128xf32>
    %4 = arith.truncf %3 : vector<4x128xf32> to vector<4x128xbf16>
    %c0_4 = arith.constant 0 : index
    %c0_5 = arith.constant 0 : index
    %c0_6 = arith.constant 0 : index
    %5 = vector.load %arg2[%c0_4, %c0_5, %c0_6] : memref<2x128x8xbf16, #tpu.memory_space<vmem>>, vector<1x128x8xbf16>
    %6 = vector.shape_cast %5 : vector<1x128x8xbf16> to vector<128x8xbf16>
    %cst_7 = arith.constant dense<0.000000e+00> : vector<4x8xf32>
    %7 = tpu.matmul %4, %6, %cst_7 {dimension_numbers = #tpu.dot_dimension_numbers<[1], [0], [0], [1], [0, 0, 1, 1], [], []>} : vector<4x128xbf16>, vector<128x8xbf16>, vector<4x8xf32> -> vector<4x8xf32>
    %c0_8 = arith.constant 0 : index
    %c0_9 = arith.constant 0 : index
    %c0_10 = arith.constant 0 : index
    %8 = vector.load %arg3[%c0_8, %c0_9, %c0_10] : memref<2x1x8xf32, #tpu.memory_space<vmem>>, vector<1x1x8xf32>
    %9 = vector.shape_cast %8 : vector<1x1x8xf32> to vector<1x8xf32>
    %10 = vector.broadcast %9 : vector<1x8xf32> to vector<4x8xf32>
    %11 = arith.addf %7, %10 : vector<4x8xf32>
    %cst_11 = arith.constant 0.000000e+00 : f32
    %12 = vector.broadcast %cst_11 : f32 to vector<4x8xf32>
    %13 = arith.maximumf %11, %12 : vector<4x8xf32>
    %14 = arith.truncf %13 : vector<4x8xf32> to vector<4x8xbf16>
    %c0_12 = arith.constant 0 : index
    %c0_13 = arith.constant 0 : index
    %c0_14 = arith.constant 0 : index
    %15 = vector.load %arg4[%c0_12, %c0_13, %c0_14] : memref<2x8x128xbf16, #tpu.memory_space<vmem>>, vector<1x8x128xbf16>
    %16 = vector.shape_cast %15 : vector<1x8x128xbf16> to vector<8x128xbf16>
    %cst_15 = arith.constant dense<0.000000e+00> : vector<4x128xf32>
    %17 = tpu.matmul %14, %16, %cst_15 {dimension_numbers = #tpu.dot_dimension_numbers<[1], [0], [0], [1], [0, 0, 1, 1], [], []>} : vector<4x8xbf16>, vector<8x128xbf16>, vector<4x128xf32> -> vector<4x128xf32>
    %c0_16 = arith.constant 0 : index
    %c0_17 = arith.constant 0 : index
    %18 = vector.load %arg7[%c0_16, %c0_17] : memref<4x128xf32, #tpu.memory_space<vmem>>, vector<4x128xf32>
    %19 = arith.addf %18, %17 : vector<4x128xf32>
    %c0_18 = arith.constant 0 : index
    %c0_19 = arith.constant 0 : index
    %20 = vector.load %arg7[%c0_18, %c0_19] : memref<4x128xf32, #tpu.memory_space<vmem>>, vector<4x128xf32>
    tpu.vector_store %arg7[%c0_18, %c0_19], %19 {strides = array<i32>} : memref<4x128xf32, #tpu.memory_space<vmem>>, vector<4x128xf32>,
    %c1 = arith.constant 1 : index
    %c0_20 = arith.constant 0 : index
    %c0_21 = arith.constant 0 : index
    %21 = vector.load %arg1[%c1, %c0_20, %c0_21] : memref<2x4x128xf32, #tpu.memory_space<vmem>>, vector<1x4x128xf32>
    %22 = vector.shape_cast %21 : vector<1x4x128xf32> to vector<4x128xf32>
    %23 = arith.truncf %22 : vector<4x128xf32> to vector<4x128xbf16>
    %c1_22 = arith.constant 1 : index
    %c0_23 = arith.constant 0 : index
    %c0_24 = arith.constant 0 : index
    %24 = vector.load %arg2[%c1_22, %c0_23, %c0_24] : memref<2x128x8xbf16, #tpu.memory_space<vmem>>, vector<1x128x8xbf16>
    %25 = vector.shape_cast %24 : vector<1x128x8xbf16> to vector<128x8xbf16>
    %cst_25 = arith.constant dense<0.000000e+00> : vector<4x8xf32>
    %26 = tpu.matmul %23, %25, %cst_25 {dimension_numbers = #tpu.dot_dimension_numbers<[1], [0], [0], [1], [0, 0, 1, 1], [], []>} : vector<4x128xbf16>, vector<128x8xbf16>, vector<4x8xf32> -> vector<4x8xf32>
    %c1_26 = arith.constant 1 : index
    %c0_27 = arith.constant 0 : index
    %c0_28 = arith.constant 0 : index
    %27 = vector.load %arg3[%c1_26, %c0_27, %c0_28] : memref<2x1x8xf32, #tpu.memory_space<vmem>>, vector<1x1x8xf32>
    %28 = vector.shape_cast %27 : vector<1x1x8xf32> to vector<1x8xf32>
    %29 = vector.broadcast %28 : vector<1x8xf32> to vector<4x8xf32>
    %30 = arith.addf %26, %29 : vector<4x8xf32>
    %cst_29 = arith.constant 0.000000e+00 : f32
    %31 = vector.broadcast %cst_29 : f32 to vector<4x8xf32>
    %32 = arith.maximumf %30, %31 : vector<4x8xf32>
    %33 = arith.truncf %32 : vector<4x8xf32> to vector<4x8xbf16>
    %c1_30 = arith.constant 1 : index
    %c0_31 = arith.constant 0 : index
    %c0_32 = arith.constant 0 : index
    %34 = vector.load %arg4[%c1_30, %c0_31, %c0_32] : memref<2x8x128xbf16, #tpu.memory_space<vmem>>, vector<1x8x128xbf16>
    %35 = vector.shape_cast %34 : vector<1x8x128xbf16> to vector<8x128xbf16>
    %cst_33 = arith.constant dense<0.000000e+00> : vector<4x128xf32>
    %36 = tpu.matmul %33, %35, %cst_33 {dimension_numbers = #tpu.dot_dimension_numbers<[1], [0], [0], [1], [0, 0, 1, 1], [], []>} : vector<4x8xbf16>, vector<8x128xbf16>, vector<4x128xf32> -> vector<4x128xf32>
    %c0_34 = arith.constant 0 : index
    %c0_35 = arith.constant 0 : index
    %37 = vector.load %arg7[%c0_34, %c0_35] : memref<4x128xf32, #tpu.memory_space<vmem>>, vector<4x128xf32>
    %38 = arith.addf %37, %36 : vector<4x128xf32>
    %c0_36 = arith.constant 0 : index
    %c0_37 = arith.constant 0 : index
    %39 = vector.load %arg7[%c0_36, %c0_37] : memref<4x128xf32, #tpu.memory_space<vmem>>, vector<4x128xf32>
    tpu.vector_store %arg7[%c0_36, %c0_37], %38 {strides = array<i32>} : memref<4x128xf32, #tpu.memory_space<vmem>>, vector<4x128xf32>,
    %c0_38 = arith.constant 0 : index
    %c0_39 = arith.constant 0 : index
    %40 = vector.load %arg7[%c0_38, %c0_39] : memref<4x128xf32, #tpu.memory_space<vmem>>, vector<4x128xf32>
    %cst_40 = arith.constant 5.000000e-01 : f32
    %41 = vector.broadcast %cst_40 : f32 to vector<4x128xf32>
    %42 = arith.mulf %40, %41 : vector<4x128xf32>
    %c0_41 = arith.constant 0 : index
    %c0_42 = arith.constant 0 : index
    %43 = vector.load %arg5[%c0_41, %c0_42] : memref<1x128xf32, #tpu.memory_space<vmem>>, vector<1x128xf32>
    %44 = vector.broadcast %43 : vector<1x128xf32> to vector<4x128xf32>
    %45 = arith.addf %42, %44 : vector<4x128xf32>
    %46 = arith.negf %45 : vector<4x128xf32>
    %47 = math.exp %46 : vector<4x128xf32>
    %cst_43 = arith.constant 1.000000e+00 : f32
    %48 = vector.broadcast %cst_43 : f32 to vector<4x128xf32>
    %49 = arith.addf %48, %47 : vector<4x128xf32>
    %50 = arith.divf %48, %49 : vector<4x128xf32>
    %c0_44 = arith.constant 0 : index
    %c0_45 = arith.constant 0 : index
    %51 = vector.load %arg7[%c0_44, %c0_45] : memref<4x128xf32, #tpu.memory_space<vmem>>, vector<4x128xf32>
    tpu.vector_store %arg7[%c0_44, %c0_45], %50 {strides = array<i32>} : memref<4x128xf32, #tpu.memory_space<vmem>>, vector<4x128xf32>,
    %c0_46 = arith.constant 0 : index
    %c0_47 = arith.constant 0 : index
    %c0_48 = arith.constant 0 : index
    %52 = vector.load %arg1[%c0_46, %c0_47, %c0_48] : memref<2x4x128xf32, #tpu.memory_space<vmem>>, vector<1x4x128xf32>
    %53 = vector.shape_cast %52 : vector<1x4x128xf32> to vector<4x128xf32>
    %c0_49 = arith.constant 0 : index
    %c0_50 = arith.constant 0 : index
    %54 = vector.load %arg7[%c0_49, %c0_50] : memref<4x128xf32, #tpu.memory_space<vmem>>, vector<4x128xf32>
    %55 = arith.mulf %53, %54 : vector<4x128xf32>
    %c0_51 = arith.constant 0 : index
    %c0_52 = arith.constant 0 : index
    %c0_53 = arith.constant 0 : index
    %56 = vector.load %arg6[%c0_51, %c0_52, %c0_53] : memref<2x4x128xf32, #tpu.memory_space<vmem>>, vector<1x4x128xf32>
    %57 = vector.shape_cast %56 : vector<1x4x128xf32> to vector<4x128xf32>
    %58 = vector.shape_cast %55 : vector<4x128xf32> to vector<1x4x128xf32>
    tpu.vector_store %arg6[%c0_51, %c0_52, %c0_53], %58 {strides = array<i32>} : memref<2x4x128xf32, #tpu.memory_space<vmem>>, vector<1x4x128xf32>,
    %c1_54 = arith.constant 1 : index
    %c0_55 = arith.constant 0 : index
    %c0_56 = arith.constant 0 : index
    %59 = vector.load %arg1[%c1_54, %c0_55, %c0_56] : memref<2x4x128xf32, #tpu.memory_space<vmem>>, vector<1x4x128xf32>
    %60 = vector.shape_cast %59 : vector<1x4x128xf32> to vector<4x128xf32>
    %c0_57 = arith.constant 0 : index
    %c0_58 = arith.constant 0 : index
    %61 = vector.load %arg7[%c0_57, %c0_58] : memref<4x128xf32, #tpu.memory_space<vmem>>, vector<4x128xf32>
    %62 = arith.mulf %60, %61 : vector<4x128xf32>
    %c1_59 = arith.constant 1 : index
    %c0_60 = arith.constant 0 : index
    %c0_61 = arith.constant 0 : index
    %63 = vector.load %arg6[%c1_59, %c0_60, %c0_61] : memref<2x4x128xf32, #tpu.memory_space<vmem>>, vector<1x4x128xf32>
    %64 = vector.shape_cast %63 : vector<1x4x128xf32> to vector<4x128xf32>
    %65 = vector.shape_cast %62 : vector<4x128xf32> to vector<1x4x128xf32>
    tpu.vector_store %arg6[%c1_59, %c0_60, %c0_61], %65 {strides = array<i32>} : memref<2x4x128xf32, #tpu.memory_space<vmem>>, vector<1x4x128xf32>,
    return
  }
  func.func @transform_0(%arg0: i32) -> (i32, i32, i32) {
    %c0_i32 = arith.constant 0 : i32
    %c0_i32_0 = arith.constant 0 : i32
    %c0_i32_1 = arith.constant 0 : i32
    return %c0_i32, %arg0, %c0_i32_0 : i32, i32, i32
  }
  func.func @transform_1(%arg0: i32) -> (i32, i32, i32) {
    %c0_i32 = arith.constant 0 : i32
    %c0_i32_0 = arith.constant 0 : i32
    %c0_i32_1 = arith.constant 0 : i32
    %c0_i32_2 = arith.constant 0 : i32
    return %c0_i32, %c0_i32_0, %c0_i32_1 : i32, i32, i32
  }
  func.func @transform_2(%arg0: i32) -> (i32, i32, i32) {
    %c0_i32 = arith.constant 0 : i32
    %c0_i32_0 = arith.constant 0 : i32
    %c0_i32_1 = arith.constant 0 : i32
    %c0_i32_2 = arith.constant 0 : i32
    return %c0_i32, %c0_i32_0, %c0_i32_1 : i32, i32, i32
  }
  func.func @transform_3(%arg0: i32) -> (i32, i32, i32) {
    %c0_i32 = arith.constant 0 : i32
    %c0_i32_0 = arith.constant 0 : i32
    %c0_i32_1 = arith.constant 0 : i32
    %c0_i32_2 = arith.constant 0 : i32
    return %c0_i32, %c0_i32_0, %c0_i32_1 : i32, i32, i32
  }
  func.func @transform_4(%arg0: i32) -> (i32, i32) {
    %c0_i32 = arith.constant 0 : i32
    %c0_i32_0 = arith.constant 0 : i32
    %c0_i32_1 = arith.constant 0 : i32
    return %c0_i32, %c0_i32_0 : i32, i32
  }
  func.func @transform_5(%arg0: i32) -> (i32, i32, i32) {
    %c0_i32 = arith.constant 0 : i32
    %c0_i32_0 = arith.constant 0 : i32
    %c0_i32_1 = arith.constant 0 : i32
    return %c0_i32, %arg0, %c0_i32_0 : i32, i32, i32
  }
  func.func @transform_6(%arg0: i32) -> (i32, i32) {
    %c0_i32 = arith.constant 0 : i32
    %c0_i32_0 = arith.constant 0 : i32
    return %arg0, %c0_i32 : i32, i32
  }
}

</mosaic_0001>

<llo_original>
// kernel: tpu_custom_call.1
$region0: #{tpu_custom_call.1}
  #allocation0 [shape = 'u32[]', space=smem, size = 0x4, offset = 0x4, fixed_abs, tag = 'smem constant byte address 0x4 - core index']
  #allocation1 [shape = 'u32[144,128]{1,0:T(1,128)}', space=vmem, size = 0x12000, scoped, tag = 'internal scratch']
  %s0 = inlined_call_operand.vmem [shape: f32[2,4,128], index: 0, kind: input, shape index: {}]
  %s1 = inlined_call_operand.vmem [shape: bf16[2,128,8], index: 1, kind: input, shape index: {}]
  %s2 = inlined_call_operand.vmem [shape: f32[2,1,8], index: 2, kind: input, shape index: {}]
  %s3 = inlined_call_operand.vmem [shape: bf16[2,8,128], index: 3, kind: input, shape index: {}]
  %s4 = inlined_call_operand.vmem [shape: f32[1,128], index: 4, kind: input, shape index: {}]
  %s5 = inlined_call_operand.hbm [shape: f32[2,4,128], index: 5, kind: output, shape index: {0}]
  %s6 = inlined_call_operand.hbm [shape: f32[4,128], index: 6, kind: output, shape index: {1}]
  %7 = xla_tuple %s5, %s6
  %s8 = sld [smem:[#allocation0]]
  $region38: #{tpu_custom_call.1} parent=0
    _
  %s10 = ssub.s32 1, %s8
  %s11 = scalar_select 0, %s10, %s8
  $region1: #{tpu_custom_call.1} parent=0
    #allocation2 [shape = 'u8[4096]{0}', space=vmem, size = 0x1000, scoped, tag = 'output window, operand 0, single buffered']
    #allocation3 [shape = 's32[1]{0}', space=sflag, size = 0x4, scoped, tag = 'scoped memory for tpu_custom_call.1']
    #allocation4 [shape = 'u8[2048]{0}', space=vmem, size = 0x800, scoped, tag = 'output window, operand 1, single buffered']
    #allocation5 [shape = 's32[1]{0}', space=sflag, size = 0x4, scoped, tag = 'scoped memory for tpu_custom_call.1']
    %12 = vsyncpa [#allocation3], 0
    %13 = vsyncpa [#allocation5], 0
    // Predicated region
    $region2: #{tpu_custom_call.1} parent=1 // pred_check
      _
    $region3: #{tpu_custom_call.1} parent=1 // pred_check_branch
      %15 = sbr.rel (0) target = $region5
    $region4: #{tpu_custom_call.1} parent=1 // pred_region
      _
    $region5: #{tpu_custom_call.1} parent=1 // pred_fallthru
      _
    // Predicated region
    $region6: #{tpu_custom_call.1} parent=1 // pred_check
      _
    $region7: #{tpu_custom_call.1} parent=1 // pred_check_branch
      %17 = sbr.rel (0) target = $region9
    $region8: #{tpu_custom_call.1} parent=1 // pred_region
      _
    $region9: #{tpu_custom_call.1} parent=1 // pred_fallthru
      _
    // Predicated region
    $region10: #{tpu_custom_call.1} parent=1 // pred_check
      _
    $region11: #{tpu_custom_call.1} parent=1 // pred_check_branch
      %19 = sbr.rel (0) target = $region13
    $region12: #{tpu_custom_call.1} parent=1 // pred_region
      _
    $region13: #{tpu_custom_call.1} parent=1 // pred_fallthru
      _
    // Predicated region
    $region14: #{tpu_custom_call.1} parent=1 // pred_check
      _
    $region15: #{tpu_custom_call.1} parent=1 // pred_check_branch
      %21 = sbr.rel (0) target = $region17
    $region16: #{tpu_custom_call.1} parent=1 // pred_region
      _
    $region17: #{tpu_custom_call.1} parent=1 // pred_fallthru
      _
    // Predicated region
    $region18: #{tpu_custom_call.1} parent=1 // pred_check
      _
    $region19: #{tpu_custom_call.1} parent=1 // pred_check_branch
      %23 = sbr.rel (0) target = $region21
    $region20: #{tpu_custom_call.1} parent=1 // pred_region
      _
    $region21: #{tpu_custom_call.1} parent=1 // pred_fallthru
      _
    %25 = vst [vmem:[#allocation4] sm:$0xf] 0.0
    %v26 = vld [vmem:[%s0] sm:$0xf]
    %v27 = vpack.c.bf16 %v26, %v26
    %v28 = vld [vmem:[%s1] sm:$0xf]
    %v29 = vld [vmem:[%s1 + $0x4] sm:$0xf]
    %v30 = vld [vmem:[%s1 + $0x8] sm:$0xf]
    %v31 = vld [vmem:[%s1 + $0xc] sm:$0xf]
    %v32 = vld [vmem:[%s1 + $0x10] sm:$0xf]
    %v33 = vld [vmem:[%s1 + $0x14] sm:$0xf]
    %v34 = vld [vmem:[%s1 + $0x18] sm:$0xf]
    %v35 = vld [vmem:[%s1 + $0x1c] sm:$0xf]
    %v36 = vld [vmem:[%s1 + $0x20] sm:$0xf]
    %v37 = vld [vmem:[%s1 + $0x24] sm:$0xf]
    %v38 = vld [vmem:[%s1 + $0x28] sm:$0xf]
    %v39 = vld [vmem:[%s1 + $0x2c] sm:$0xf]
    %v40 = vld [vmem:[%s1 + $0x30] sm:$0xf]
    %v41 = vld [vmem:[%s1 + $0x34] sm:$0xf]
    %v42 = vld [vmem:[%s1 + $0x38] sm:$0xf]
    %v43 = vld [vmem:[%s1 + $0x3c] sm:$0xf]
    %v44 = vld [vmem:[%s2] sm:$0x1]
    %v46 = vlaneseq
    %v47 = vshrl.u32 %v46, 7
    %v48 = vsub.s32 0, %v47
    %v49 = vrot.slane %v44, %v48
    %v67 = vunpack.c.l.b16 %v28
    %v68 = vunpack.c.l.b16 %v29
    %v69 = vunpack.c.l.b16 %v30
    %v70 = vunpack.c.l.b16 %v31
    %v71 = vunpack.c.l.b16 %v32
    %v72 = vunpack.c.l.b16 %v33
    %v73 = vunpack.c.l.b16 %v34
    %v74 = vunpack.c.l.b16 %v35
    %v75 = vunpack.c.l.b16 %v36
    %v76 = vunpack.c.l.b16 %v37
    %v77 = vunpack.c.l.b16 %v38
    %v78 = vunpack.c.l.b16 %v39
    %v79 = vunpack.c.l.b16 %v40
    %v80 = vunpack.c.l.b16 %v41
    %v81 = vunpack.c.l.b16 %v42
    %v82 = vunpack.c.l.b16 %v43
    %v83 = vpack.c.b16 %v68, %v67
    %v84 = vpack.c.b16 %v70, %v69
    %v85 = vpack.c.b16 %v72, %v71
    %v86 = vpack.c.b16 %v74, %v73
    %v87 = vpack.c.b16 %v76, %v75
    %v88 = vpack.c.b16 %v78, %v77
    %v89 = vpack.c.b16 %v80, %v79
    %v90 = vpack.c.b16 %v82, %v81
    %99 = vmatprep.subr.bf16.mxu0 0
    %100 = vmatpush1.bf16.msra.mxu0 %v90
    %101 = vmatprep.subr.bf16.mxu0 0
    %102 = vmatpush1.bf16.msra.mxu0 %v89
    %103 = vmatprep.subr.bf16.mxu0 0
    %104 = vmatpush1.bf16.msra.mxu0 %v88
    %105 = vmatprep.subr.bf16.mxu0 0
    %106 = vmatpush1.bf16.msra.mxu0 %v87
    %107 = vmatprep.subr.bf16.mxu0 0
    %108 = vmatpush1.bf16.msra.mxu0 %v86
    %109 = vmatprep.subr.bf16.mxu0 0
    %110 = vmatpush1.bf16.msra.mxu0 %v85
    %111 = vmatprep.subr.bf16.mxu0 0
    %112 = vmatpush1.bf16.msra.mxu0 %v84
    %113 = vmatprep.subr.bf16.mxu0 0
    %114 = vmatpush1.bf16.msra.mxu0 %v83
    %115 = vmatprep.subr.bf16.mxu0 0
    %116 = vmatpush2.bf16.msra.mxu0 0
    %117 = vmatprep.subr.bf16.mxu0 0
    %118 = vmatpush2.bf16.msra.mxu0 0
    %119 = vmatprep.subr.bf16.mxu0 0
    %120 = vmatpush2.bf16.msra.mxu0 0
    %121 = vmatprep.subr.bf16.mxu0 0
    %122 = vmatpush2.bf16.msra.mxu0 0
    %123 = vmatprep.subr.bf16.mxu0 0
    %124 = vmatpush2.bf16.msra.mxu0 0
    %125 = vmatprep.subr.bf16.mxu0 0
    %126 = vmatpush2.bf16.msra.mxu0 0
    %127 = vmatprep.subr.bf16.mxu0 0
    %128 = vmatpush2.bf16.msra.mxu0 0
    %129 = vmatprep.subr.bf16.mxu0 0
    %130 = vmatpush2.bf16.msra.mxu0 0
    %131 = vmatprep.mubr.bf16.mxu0 0
    %132 = vmatmul.mubr.bf16.gmra.mxu0 %v27
    %v133 = vpop.f32.mrf.mxu0
    %v134 = vadd.f32 %v49, %v133
    %v135 = vpop.f32.mrf.mxu0
    %v136 = vpop.f32.mrf.mxu0
    %v137 = vpop.f32.mrf.mxu0
    %138 = vdwg.mxu0
    %v139 = vmax.f32 %v134, 0.0
    %v140 = vpack.c.bf16 %v139, %v139
    %v141 = vld [vmem:[%s3] sm:$0xf]
    %vm142 = vcmask 64512
    %v144 = vsel %vm142, %v140, 0
    %vm146 = vcmask 1043456
    %v148 = vsel %vm146, %v141, 0
    %150 = vmatprep.subr.bf16.mxu0 0
    %151 = vmatpush1.bf16.msra.mxu0 0
    %152 = vmatprep.subr.bf16.mxu0 0
    %153 = vmatpush1.bf16.msra.mxu0 0
    %154 = vmatprep.subr.bf16.mxu0 0
    %155 = vmatpush1.bf16.msra.mxu0 0
    %156 = vmatprep.subr.bf16.mxu0 0
    %157 = vmatpush1.bf16.msra.mxu0 0
    %158 = vmatprep.subr.bf16.mxu0 0
    %159 = vmatpush1.bf16.msra.mxu0 0
    %160 = vmatprep.subr.bf16.mxu0 0
    %161 = vmatpush1.bf16.msra.mxu0 0
    %162 = vmatprep.subr.bf16.mxu0 0
    %163 = vmatpush1.bf16.msra.mxu0 0
    %164 = vmatprep.subr.bf16.mxu0 0
    %165 = vmatpush1.bf16.msra.mxu0 %v148
    %166 = vmatprep.subr.bf16.mxu0 0
    %167 = vmatpush2.bf16.msra.mxu0 0
    %168 = vmatprep.subr.bf16.mxu0 0
    %169 = vmatpush2.bf16.msra.mxu0 0
    %170 = vmatprep.subr.bf16.mxu0 0
    %171 = vmatpush2.bf16.msra.mxu0 0
    %172 = vmatprep.subr.bf16.mxu0 0
    %173 = vmatpush2.bf16.msra.mxu0 0
    %174 = vmatprep.subr.bf16.mxu0 0
    %175 = vmatpush2.bf16.msra.mxu0 0
    %176 = vmatprep.subr.bf16.mxu0 0
    %177 = vmatpush2.bf16.msra.mxu0 0
    %178 = vmatprep.subr.bf16.mxu0 0
    %179 = vmatpush2.bf16.msra.mxu0 0
    %180 = vmatprep.subr.bf16.mxu0 0
    %181 = vmatpush2.bf16.msra.mxu0 0
    %182 = vmatprep.mubr.bf16.mxu0 0
    %183 = vmatmul.mubr.bf16.gmra.mxu0 %v144
    %v184 = vpop.f32.mrf.mxu0
    %v185 = vadd.f32 0.0, %v184
    %v186 = vpop.f32.mrf.mxu0
    %v187 = vpop.f32.mrf.mxu0
    %v188 = vpop.f32.mrf.mxu0
    %189 = vdwg.mxu0
    %v190 = vld [vmem:[#allocation4] sm:$0xf]
    %v191 = vadd.f32 %v190, %v185
    %192 = vst [vmem:[#allocation4] sm:$0xf] %v191
    %s193 = scalar_lea.vmem %s0, 4
    %v194 = vld [vmem:[%s193] sm:$0xf]
    %v195 = vpack.c.bf16 %v194, %v194
    %s196 = scalar_lea.vmem %s1, 64
    %v197 = vld [vmem:[%s196] sm:$0xf]
    %v198 = vld [vmem:[%s196 + $0x4] sm:$0xf]
    %v199 = vld [vmem:[%s196 + $0x8] sm:$0xf]
    %v200 = vld [vmem:[%s196 + $0xc] sm:$0xf]
    %v201 = vld [vmem:[%s196 + $0x10] sm:$0xf]
    %v202 = vld [vmem:[%s196 + $0x14] sm:$0xf]
    %v203 = vld [vmem:[%s196 + $0x18] sm:$0xf]
    %v204 = vld [vmem:[%s196 + $0x1c] sm:$0xf]
    %v205 = vld [vmem:[%s196 + $0x20] sm:$0xf]
    %v206 = vld [vmem:[%s196 + $0x24] sm:$0xf]
    %v207 = vld [vmem:[%s196 + $0x28] sm:$0xf]
    %v208 = vld [vmem:[%s196 + $0x2c] sm:$0xf]
    %v209 = vld [vmem:[%s196 + $0x30] sm:$0xf]
    %v210 = vld [vmem:[%s196 + $0x34] sm:$0xf]
    %v211 = vld [vmem:[%s196 + $0x38] sm:$0xf]
    %v212 = vld [vmem:[%s196 + $0x3c] sm:$0xf]
    %s213 = scalar_lea.vmem %s2, 1
    %v214 = vld [vmem:[%s213] sm:$0x1]
    %v216 = vlaneseq
    %v217 = vshrl.u32 %v216, 7
    %v218 = vsub.s32 0, %v217
    %v219 = vrot.slane %v214, %v218
    %v237 = vunpack.c.l.b16 %v197
    %v238 = vunpack.c.l.b16 %v198
    %v239 = vunpack.c.l.b16 %v199
    %v240 = vunpack.c.l.b16 %v200
    %v241 = vunpack.c.l.b16 %v201
    %v242 = vunpack.c.l.b16 %v202
    %v243 = vunpack.c.l.b16 %v203
    %v244 = vunpack.c.l.b16 %v204
    %v245 = vunpack.c.l.b16 %v205
    %v246 = vunpack.c.l.b16 %v206
    %v247 = vunpack.c.l.b16 %v207
    %v248 = vunpack.c.l.b16 %v208
    %v249 = vunpack.c.l.b16 %v209
    %v250 = vunpack.c.l.b16 %v210
    %v251 = vunpack.c.l.b16 %v211
    %v252 = vunpack.c.l.b16 %v212
    %v253 = vpack.c.b16 %v238, %v237
    %v254 = vpack.c.b16 %v240, %v239
    %v255 = vpack.c.b16 %v242, %v241
    %v256 = vpack.c.b16 %v244, %v243
    %v257 = vpack.c.b16 %v246, %v245
    %v258 = vpack.c.b16 %v248, %v247
    %v259 = vpack.c.b16 %v250, %v249
    %v260 = vpack.c.b16 %v252, %v251
    %269 = vmatprep.subr.bf16.mxu0 0
    %270 = vmatpush1.bf16.msra.mxu0 %v260
    %271 = vmatprep.subr.bf16.mxu0 0
    %272 = vmatpush1.bf16.msra.mxu0 %v259
    %273 = vmatprep.subr.bf16.mxu0 0
    %274 = vmatpush1.bf16.msra.mxu0 %v258
    %275 = vmatprep.subr.bf16.mxu0 0
    %276 = vmatpush1.bf16.msra.mxu0 %v257
    %277 = vmatprep.subr.bf16.mxu0 0
    %278 = vmatpush1.bf16.msra.mxu0 %v256
    %279 = vmatprep.subr.bf16.mxu0 0
    %280 = vmatpush1.bf16.msra.mxu0 %v255
    %281 = vmatprep.subr.bf16.mxu0 0
    %282 = vmatpush1.bf16.msra.mxu0 %v254
    %283 = vmatprep.subr.bf16.mxu0 0
    %284 = vmatpush1.bf16.msra.mxu0 %v253
    %285 = vmatprep.subr.bf16.mxu0 0
    %286 = vmatpush2.bf16.msra.mxu0 0
    %287 = vmatprep.subr.bf16.mxu0 0
    %288 = vmatpush2.bf16.msra.mxu0 0
    %289 = vmatprep.subr.bf16.mxu0 0
    %290 = vmatpush2.bf16.msra.mxu0 0
    %291 = vmatprep.subr.bf16.mxu0 0
    %292 = vmatpush2.bf16.msra.mxu0 0
    %293 = vmatprep.subr.bf16.mxu0 0
    %294 = vmatpush2.bf16.msra.mxu0 0
    %295 = vmatprep.subr.bf16.mxu0 0
    %296 = vmatpush2.bf16.msra.mxu0 0
    %297 = vmatprep.subr.bf16.mxu0 0
    %298 = vmatpush2.bf16.msra.mxu0 0
    %299 = vmatprep.subr.bf16.mxu0 0
    %300 = vmatpush2.bf16.msra.mxu0 0
    %301 = vmatprep.mubr.bf16.mxu0 0
    %302 = vmatmul.mubr.bf16.gmra.mxu0 %v195
    %v303 = vpop.f32.mrf.mxu0
    %v304 = vadd.f32 %v219, %v303
    %v305 = vpop.f32.mrf.mxu0
    %v306 = vpop.f32.mrf.mxu0
    %v307 = vpop.f32.mrf.mxu0
    %308 = vdwg.mxu0
    %v309 = vmax.f32 %v304, 0.0
    %v310 = vpack.c.bf16 %v309, %v309
    %s311 = scalar_lea.vmem %s3, 4
    %v312 = vld [vmem:[%s311] sm:$0xf]
    %v314 = vsel %vm142, %v310, 0
    %v317 = vsel %vm146, %v312, 0
    %319 = vmatprep.subr.bf16.mxu0 0
    %320 = vmatpush1.bf16.msra.mxu0 0
    %321 = vmatprep.subr.bf16.mxu0 0
    %322 = vmatpush1.bf16.msra.mxu0 0
    %323 = vmatprep.subr.bf16.mxu0 0
    %324 = vmatpush1.bf16.msra.mxu0 0
    %325 = vmatprep.subr.bf16.mxu0 0
    %326 = vmatpush1.bf16.msra.mxu0 0
    %327 = vmatprep.subr.bf16.mxu0 0
    %328 = vmatpush1.bf16.msra.mxu0 0
    %329 = vmatprep.subr.bf16.mxu0 0
    %330 = vmatpush1.bf16.msra.mxu0 0
    %331 = vmatprep.subr.bf16.mxu0 0
    %332 = vmatpush1.bf16.msra.mxu0 0
    %333 = vmatprep.subr.bf16.mxu0 0
    %334 = vmatpush1.bf16.msra.mxu0 %v317
    %335 = vmatprep.subr.bf16.mxu0 0
    %336 = vmatpush2.bf16.msra.mxu0 0
    %337 = vmatprep.subr.bf16.mxu0 0
    %338 = vmatpush2.bf16.msra.mxu0 0
    %339 = vmatprep.subr.bf16.mxu0 0
    %340 = vmatpush2.bf16.msra.mxu0 0
    %341 = vmatprep.subr.bf16.mxu0 0
    %342 = vmatpush2.bf16.msra.mxu0 0
    %343 = vmatprep.subr.bf16.mxu0 0
    %344 = vmatpush2.bf16.msra.mxu0 0
    %345 = vmatprep.subr.bf16.mxu0 0
    %346 = vmatpush2.bf16.msra.mxu0 0
    %347 = vmatprep.subr.bf16.mxu0 0
    %348 = vmatpush2.bf16.msra.mxu0 0
    %349 = vmatprep.subr.bf16.mxu0 0
    %350 = vmatpush2.bf16.msra.mxu0 0
    %351 = vmatprep.mubr.bf16.mxu0 0
    %352 = vmatmul.mubr.bf16.gmra.mxu0 %v314
    %v353 = vpop.f32.mrf.mxu0
    %v354 = vadd.f32 0.0, %v353
    %v355 = vpop.f32.mrf.mxu0
    %v356 = vpop.f32.mrf.mxu0
    %v357 = vpop.f32.mrf.mxu0
    %358 = vdwg.mxu0
    %v359 = vld [vmem:[#allocation4] sm:$0xf]
    %v360 = vadd.f32 %v359, %v354
    %361 = vst [vmem:[#allocation4] sm:$0xf] %v360
    %v362 = vld [vmem:[#allocation4] sm:$0xf]
    %v363 = vmul.f32 %v362, 0.5
    %v364 = vld [vmem:[%s4] sm:$0x1]
    %v366 = vlaneseq
    %v367 = vshrl.u32 %v366, 7
    %v368 = vsub.s32 0, %v367
    %v369 = vrot.slane %v364, %v368
    %v371 = vadd.f32 %v363, %v369
    %v372 = vxor.u32 %v371, 2147483648
    %v373 = vmul.f32 %v372, 1.442695
    %v374 = vpow.pop %v373
    %v375 = vadd.f32 %v374, 1.0
    %v376 = vrcp.pop %v375
    %v377 = vmul.f32 1.0, %v376
    %378 = vst [vmem:[#allocation4] sm:$0xf] %v377
    %v379 = vld [vmem:[%s0] sm:$0xf]
    %v380 = vld [vmem:[#allocation4] sm:$0xf]
    %v381 = vmul.f32 %v379, %v380
    %382 = vst [vmem:[#allocation2] sm:$0xf] %v381
    %v383 = vld [vmem:[%s193] sm:$0xf]
    %v384 = vld [vmem:[#allocation4] sm:$0xf]
    %v385 = vmul.f32 %v383, %v384
    %s386 = scalar_lea.vmem [#allocation2], 4
    %387 = vst [vmem:[%s386] sm:$0xf] %v385
    // Predicated region
    $region22: #{tpu_custom_call.1} parent=1 // pred_check
      _
    $region23: #{tpu_custom_call.1} parent=1 // pred_check_branch
      %389 = sbr.rel (0) target = $region25
    $region24: #{tpu_custom_call.1} parent=1 // pred_region
      %s391 = ssub.s32 128, 128
      %392 = vsyncadd [#allocation3], %s391
      %s393 = sshll.u32 [#allocation2], 4
      %s394 = int_to_ptr.vmem [resolvable:$true] %s393
      %399 = dma.vmem_to_hbm [thread:$0]  %s394, 128, %s5, [#allocation3], 64, 64, 4
    $region25: #{tpu_custom_call.1} parent=1 // pred_fallthru
      _
    // Predicated region
    $region26: #{tpu_custom_call.1} parent=1 // pred_check
      _
    $region27: #{tpu_custom_call.1} parent=1 // pred_check_branch
      %401 = sbr.rel (0) target = $region29
    $region28: #{tpu_custom_call.1} parent=1 // pred_region
      %s403 = ssub.s32 64, 64
      %404 = vsyncadd [#allocation5], %s403
      %s406 = sshll.u32 [#allocation4], 4
      %s407 = int_to_ptr.vmem [resolvable:$true] %s406
      %409 = dma.vmem_to_hbm [thread:$0]  %s407, 64, %s6, [#allocation5]
    $region29: #{tpu_custom_call.1} parent=1 // pred_fallthru
      _
    // Predicated region
    $region30: #{tpu_custom_call.1} parent=1 // pred_check
      _
    $region31: #{tpu_custom_call.1} parent=1 // pred_check_branch
      %411 = sbr.rel (0) target = $region33
    $region32: #{tpu_custom_call.1} parent=1 // pred_region
      %412 = dma.done [#allocation3], 128
    $region33: #{tpu_custom_call.1} parent=1 // pred_fallthru
      _
    // Predicated region
    $region34: #{tpu_custom_call.1} parent=1 // pred_check
      _
    $region35: #{tpu_custom_call.1} parent=1 // pred_check_branch
      %414 = sbr.rel (0) target = $region37
    $region36: #{tpu_custom_call.1} parent=1 // pred_region
      %415 = dma.done [#allocation5], 64
    $region37: #{tpu_custom_call.1} parent=1 // pred_fallthru
      _
    %416 = vsyncpa [#allocation3], 1
    %417 = vsyncpa [#allocation5], 1

</llo_original>
